<compile_context>
chip_gen: v7x
topology: tpu7x:2x2x1
jax: 0.10.0
libtpu: 0.0.40
codegen_flags: <defaults>
</compile_context>

<pallas_src>
import jax
import jax.numpy as jnp
from jax import lax
from jax.experimental import pallas as pl
from jax.experimental.pallas import tpu as pltpu


IN_FEATURES = 32
HIDDEN_1 = 16
HIDDEN_2 = 8

# Default batch tile (rows). Large enough to amortize per-grid-step overhead on the
# memory-bound roofline, small enough to fit comfortably under the scoped VMEM limit
# on v5e / v6e / v7x even with double buffering.
DEFAULT_BLOCK_BATCH = 16384


def classifier_kernel(x_ref, w2_ref, b2_ref, w3_ref, b3_ref, w4_ref, b4_ref, o_ref):
    """One batch tile of the fused forward pass, batch mapped to the lane axis."""
    # x tile: (TB, 32).  Cast to bf16 in VMEM for single-pass MXU matmuls.
    x = x_ref[...].astype(jnp.bfloat16)

    # fc2: (16, 32) . (TB, 32)^T -> (16, TB); contraction on the 32-dim of both
    # operands so no explicit transpose of x is needed.  f32 accumulation.
    h = lax.dot_general(
        w2_ref[...], x,
        dimension_numbers=(((1,), (1,)), ((), ())),
        preferred_element_type=jnp.float32,
    )
    h = h + b2_ref[...]                    # (16, TB) + (16, 1)
    h = h * jax.nn.sigmoid(h)              # SiLU in f32 (lane-dense, EUP)

    # fc3: (8, 16) @ (16, TB) -> (8, TB)
    h = jnp.dot(w3_ref[...], h.astype(jnp.bfloat16),
                preferred_element_type=jnp.float32) + b3_ref[...]
    h = h * jax.nn.sigmoid(h)

    # fc4: (out_dim, 8) @ (8, TB) -> (out_dim, TB)   (no activation)
    out = jnp.dot(w4_ref[...], h.astype(jnp.bfloat16),
                  preferred_element_type=jnp.float32) + b4_ref[...]

    o_ref[...] = out.astype(o_ref.dtype)   # lane-dense, unmasked store


def _round_up(n, m):
    return ((n + m - 1) // m) * m


def _choose_tb(batch, block_batch, *, min_steps=8):
    """Pick the batch tile (lane axis of the intermediates / output)."""
    if batch <= 128:
        # Single full-extent block: block dims == array dims is always legal.
        return batch
    # Aim for >= min_steps grid steps so the two v7x TensorCores each get several
    # steps and the double-buffered pipeline has depth; keep tiles 128-lane aligned.
    tb = _round_up(pl.cdiv(batch, min_steps), 128)
    return max(128, min(_round_up(block_batch, 128), tb))


def classifier_forward(x, params, *, block_batch=DEFAULT_BLOCK_BATCH):
    """Pallas forward.

    x      : (B, 32) float32 or bfloat16.
    params : (w2, b2, w3, b3, w4, b4) in PyTorch orientation — W as (out, in),
             b as (out, 1).
    returns: (B, output_dim) float32.
    """
    w2, b2, w3, b3, w4, b4 = params
    B = x.shape[0]
    out_dim = w4.shape[0]

    # bf16 matmul operands (tiny arrays, cast once); biases stay f32 (added post-MXU).
    w2b = w2.astype(jnp.bfloat16)
    w3b = w3.astype(jnp.bfloat16)
    w4b = w4.astype(jnp.bfloat16)

    tb = _choose_tb(B, block_batch)
    grid = (pl.cdiv(B, tb),)   # ragged last block handled by Pallas output masking

    def resident_spec(shape):
        # Full-array block with a constant index_map -> DMA'd once, VMEM-resident.
        nd = len(shape)
        return pl.BlockSpec(shape, lambda i, _nd=nd: (0,) * _nd)

    in_specs = [
        pl.BlockSpec((tb, IN_FEATURES), lambda i: (i, 0)),   # x: tiled over batch
        resident_spec(w2b.shape),
        resident_spec(b2.shape),
        resident_spec(w3b.shape),
        resident_spec(b3.shape),
        resident_spec(w4b.shape),
        resident_spec(b4.shape),
    ]

    out_t = pl.pallas_call(
        classifier_kernel,
        out_shape=jax.ShapeDtypeStruct((out_dim, B), jnp.float32),
        grid_spec=pltpu.PrefetchScalarGridSpec(
            num_scalar_prefetch=0,
            grid=grid,
            in_specs=in_specs,
            out_specs=pl.BlockSpec((out_dim, tb), lambda i: (0, i)),
        ),
        compiler_params=pltpu.CompilerParams(
            # Independent batch tiles -> shard across both TensorCores on v7x.
            dimension_semantics=("parallel",),
            # Conservative budget that fits v7x (64 MiB physical) as well as v5e/v6e.
            vmem_limit_bytes=32 * 1024 * 1024,
        ),
    )(x, w2b, b2, w3b, b3, w4b, b4)

    # (out_dim, B) -> (B, out_dim); tiny array, negligible cost vs the x stream.
    return out_t.T


def init_params(key, output_dim):
    """Deterministic synthetic parameters (PyTorch Linear-like uniform init)."""
    ks = jax.random.split(key, 6)

    def linear(kw, kb, fan_in, fan_out):
        bound = 1.0 / float(fan_in) ** 0.5
        w = jax.random.uniform(kw, (fan_out, fan_in), jnp.float32, -bound, bound)
        b = jax.random.uniform(kb, (fan_out, 1), jnp.float32, -bound, bound)
        return w, b

    w2, b2 = linear(ks[0], ks[1], IN_FEATURES, HIDDEN_1)
    w3, b3 = linear(ks[2], ks[3], HIDDEN_1, HIDDEN_2)
    w4, b4 = linear(ks[4], ks[5], HIDDEN_2, output_dim)
    return (w2, b2, w3, b3, w4, b4)


def reference_forward(x, params):
    """Pure-JAX f32 reference matching the PyTorch module."""
    w2, b2, w3, b3, w4, b4 = params
    h = x @ w2.T + b2[:, 0]
    h = h * jax.nn.sigmoid(h)
    h = h @ w3.T + b3[:, 0]
    h = h * jax.nn.sigmoid(h)
    return h @ w4.T + b4[:, 0]


if __name__ == "__main__":
    key = jax.random.PRNGKey(0)
    k_x, k_p, k_x2 = jax.random.split(key, 3)

    output_dim = 4
    params = init_params(k_p, output_dim)

    # Small case: single full-extent block.
    batch = 8
    x = jax.random.normal(k_x, (batch, IN_FEATURES), dtype=jnp.float32)
    out = jax.block_until_ready(classifier_forward(x, params))
    ref = reference_forward(x, params)
    assert out.shape == (batch, output_dim)
    # Tolerance loosened vs f32 reference because matmul operands are bf16.
    assert jnp.allclose(out, ref, atol=5e-2, rtol=5e-2), "mismatch vs reference (B=8)"

    # Multi-step grid + ragged last block (tb=128 -> grid of 3 steps for B=300).
    batch2 = 300
    x2 = jax.random.normal(k_x2, (batch2, IN_FEATURES), dtype=jnp.float32)
    out2 = jax.block_until_ready(classifier_forward(x2, params))
    ref2 = reference_forward(x2, params)
    assert out2.shape == (batch2, output_dim)
    assert jnp.allclose(out2, ref2, atol=5e-2, rtol=5e-2), "mismatch vs reference (B=300)"

    print("KERNEL_OK")
</pallas_src>

<mosaic_0001>
module attributes {stable_mosaic.version = 11 : i64} {
  func.func @classifier_kernel(%arg0: i32, %arg1: memref<8x32xf32, #tpu.memory_space<vmem>>, %arg2: memref<16x32xbf16, #tpu.memory_space<vmem>>, %arg3: memref<16x1xf32, #tpu.memory_space<vmem>>, %arg4: memref<8x16xbf16, #tpu.memory_space<vmem>>, %arg5: memref<8x1xf32, #tpu.memory_space<vmem>>, %arg6: memref<4x8xbf16, #tpu.memory_space<vmem>>, %arg7: memref<4x1xf32, #tpu.memory_space<vmem>>, %arg8: memref<4x8xf32, #tpu.memory_space<vmem>>) attributes {dimension_semantics = [#tpu.dimension_semantics<parallel>], iteration_bounds = array<i64: 1>, scalar_prefetch = 0 : i64, scratch_operands = 0 : i64, tpu.core_type = #tpu.core_type<tc>, window_params = [{transform_indices = @transform_0, window_bounds = array<i64: 8, 32>}, {pipeline_mode = #tpu.pipeline_mode<synchronous>, transform_indices = @transform_1, window_bounds = array<i64: 16, 32>}, {pipeline_mode = #tpu.pipeline_mode<synchronous>, transform_indices = @transform_2, window_bounds = array<i64: 16, 1>}, {pipeline_mode = #tpu.pipeline_mode<synchronous>, transform_indices = @transform_3, window_bounds = array<i64: 8, 16>}, {pipeline_mode = #tpu.pipeline_mode<synchronous>, transform_indices = @transform_4, window_bounds = array<i64: 8, 1>}, {pipeline_mode = #tpu.pipeline_mode<synchronous>, transform_indices = @transform_5, window_bounds = array<i64: 4, 8>}, {pipeline_mode = #tpu.pipeline_mode<synchronous>, transform_indices = @transform_6, window_bounds = array<i64: 4, 1>}, {transform_indices = @transform_7, window_bounds = array<i64: 4, 8>}]} {
    %c0 = arith.constant 0 : index
    %c0_0 = arith.constant 0 : index
    %0 = vector.load %arg1[%c0, %c0_0] : memref<8x32xf32, #tpu.memory_space<vmem>>, vector<8x32xf32>
    %1 = arith.truncf %0 : vector<8x32xf32> to vector<8x32xbf16>
    %c0_1 = arith.constant 0 : index
    %c0_2 = arith.constant 0 : index
    %2 = vector.load %arg2[%c0_1, %c0_2] : memref<16x32xbf16, #tpu.memory_space<vmem>>, vector<16x32xbf16>
    %cst = arith.constant dense<0.000000e+00> : vector<16x8xf32>
    %3 = tpu.matmul %2, %1, %cst {dimension_numbers = #tpu.dot_dimension_numbers<[1], [1], [0], [0], [0, 0, 1, 0], [], []>} : vector<16x32xbf16>, vector<8x32xbf16>, vector<16x8xf32> -> vector<16x8xf32>
    %c0_3 = arith.constant 0 : index
    %c0_4 = arith.constant 0 : index
    %4 = vector.load %arg3[%c0_3, %c0_4] : memref<16x1xf32, #tpu.memory_space<vmem>>, vector<16x1xf32>
    %5 = vector.broadcast %4 : vector<16x1xf32> to vector<16x8xf32>
    %6 = arith.addf %3, %5 : vector<16x8xf32>
    %7 = arith.negf %6 : vector<16x8xf32>
    %8 = math.exp %7 : vector<16x8xf32>
    %cst_5 = arith.constant 1.000000e+00 : f32
    %9 = vector.broadcast %cst_5 : f32 to vector<16x8xf32>
    %10 = arith.addf %9, %8 : vector<16x8xf32>
    %11 = arith.divf %9, %10 : vector<16x8xf32>
    %12 = arith.mulf %6, %11 : vector<16x8xf32>
    %c0_6 = arith.constant 0 : index
    %c0_7 = arith.constant 0 : index
    %13 = vector.load %arg4[%c0_6, %c0_7] : memref<8x16xbf16, #tpu.memory_space<vmem>>, vector<8x16xbf16>
    %14 = arith.truncf %12 : vector<16x8xf32> to vector<16x8xbf16>
    %cst_8 = arith.constant dense<0.000000e+00> : vector<8x8xf32>
    %15 = tpu.matmul %13, %14, %cst_8 {dimension_numbers = #tpu.dot_dimension_numbers<[1], [0], [0], [1], [0, 0, 1, 1], [], []>} : vector<8x16xbf16>, vector<16x8xbf16>, vector<8x8xf32> -> vector<8x8xf32>
    %c0_9 = arith.constant 0 : index
    %c0_10 = arith.constant 0 : index
    %16 = vector.load %arg5[%c0_9, %c0_10] : memref<8x1xf32, #tpu.memory_space<vmem>>, vector<8x1xf32>
    %17 = vector.broadcast %16 : vector<8x1xf32> to vector<8x8xf32>
    %18 = arith.addf %15, %17 : vector<8x8xf32>
    %19 = arith.negf %18 : vector<8x8xf32>
    %20 = math.exp %19 : vector<8x8xf32>
    %cst_11 = arith.constant 1.000000e+00 : f32
    %21 = vector.broadcast %cst_11 : f32 to vector<8x8xf32>
    %22 = arith.addf %21, %20 : vector<8x8xf32>
    %23 = arith.divf %21, %22 : vector<8x8xf32>
    %24 = arith.mulf %18, %23 : vector<8x8xf32>
    %c0_12 = arith.constant 0 : index
    %c0_13 = arith.constant 0 : index
    %25 = vector.load %arg6[%c0_12, %c0_13] : memref<4x8xbf16, #tpu.memory_space<vmem>>, vector<4x8xbf16>
    %26 = arith.truncf %24 : vector<8x8xf32> to vector<8x8xbf16>
    %cst_14 = arith.constant dense<0.000000e+00> : vector<4x8xf32>
    %27 = tpu.matmul %25, %26, %cst_14 {dimension_numbers = #tpu.dot_dimension_numbers<[1], [0], [0], [1], [0, 0, 1, 1], [], []>} : vector<4x8xbf16>, vector<8x8xbf16>, vector<4x8xf32> -> vector<4x8xf32>
    %c0_15 = arith.constant 0 : index
    %c0_16 = arith.constant 0 : index
    %28 = vector.load %arg7[%c0_15, %c0_16] : memref<4x1xf32, #tpu.memory_space<vmem>>, vector<4x1xf32>
    %29 = vector.broadcast %28 : vector<4x1xf32> to vector<4x8xf32>
    %30 = arith.addf %27, %29 : vector<4x8xf32>
    %c0_17 = arith.constant 0 : index
    %c0_18 = arith.constant 0 : index
    %31 = vector.load %arg8[%c0_17, %c0_18] : memref<4x8xf32, #tpu.memory_space<vmem>>, vector<4x8xf32>
    tpu.vector_store %arg8[%c0_17, %c0_18], %30 {strides = array<i32>} : memref<4x8xf32, #tpu.memory_space<vmem>>, vector<4x8xf32>,
    return
  }
  func.func @transform_0(%arg0: i32) -> (i32, i32) {
    %c0_i32 = arith.constant 0 : i32
    %c0_i32_0 = arith.constant 0 : i32
    return %arg0, %c0_i32 : i32, i32
  }
  func.func @transform_1(%arg0: i32) -> (i32, i32) {
    %c0_i32 = arith.constant 0 : i32
    %c0_i32_0 = arith.constant 0 : i32
    %c0_i32_1 = arith.constant 0 : i32
    return %c0_i32, %c0_i32_0 : i32, i32
  }
  func.func @transform_2(%arg0: i32) -> (i32, i32) {
    %c0_i32 = arith.constant 0 : i32
    %c0_i32_0 = arith.constant 0 : i32
    %c0_i32_1 = arith.constant 0 : i32
    return %c0_i32, %c0_i32_0 : i32, i32
  }
  func.func @transform_3(%arg0: i32) -> (i32, i32) {
    %c0_i32 = arith.constant 0 : i32
    %c0_i32_0 = arith.constant 0 : i32
    %c0_i32_1 = arith.constant 0 : i32
    return %c0_i32, %c0_i32_0 : i32, i32
  }
  func.func @transform_4(%arg0: i32) -> (i32, i32) {
    %c0_i32 = arith.constant 0 : i32
    %c0_i32_0 = arith.constant 0 : i32
    %c0_i32_1 = arith.constant 0 : i32
    return %c0_i32, %c0_i32_0 : i32, i32
  }
  func.func @transform_5(%arg0: i32) -> (i32, i32) {
    %c0_i32 = arith.constant 0 : i32
    %c0_i32_0 = arith.constant 0 : i32
    %c0_i32_1 = arith.constant 0 : i32
    return %c0_i32, %c0_i32_0 : i32, i32
  }
  func.func @transform_6(%arg0: i32) -> (i32, i32) {
    %c0_i32 = arith.constant 0 : i32
    %c0_i32_0 = arith.constant 0 : i32
    %c0_i32_1 = arith.constant 0 : i32
    return %c0_i32, %c0_i32_0 : i32, i32
  }
  func.func @transform_7(%arg0: i32) -> (i32, i32) {
    %c0_i32 = arith.constant 0 : i32
    %c0_i32_0 = arith.constant 0 : i32
    return %c0_i32, %arg0 : i32, i32
  }
}

</mosaic_0001>

<llo_original>
// kernel: tpu_custom_call.1
$region0: #{tpu_custom_call.1}
  #allocation0 [shape = 'u32[]', space=smem, size = 0x4, offset = 0x4, fixed_abs, tag = 'smem constant byte address 0x4 - core index']
  #allocation1 [shape = 'u32[144,128]{1,0:T(1,128)}', space=vmem, size = 0x12000, scoped, tag = 'internal scratch']
  %s0 = inlined_call_operand.vmem [shape: f32[8,32], index: 0, kind: input, shape index: {}]
  %s1 = inlined_call_operand.vmem [shape: bf16[16,32], index: 1, kind: input, shape index: {}]
  %s2 = inlined_call_operand.vmem [shape: f32[16,1], index: 2, kind: input, shape index: {}]
  %s3 = inlined_call_operand.vmem [shape: bf16[8,16], index: 3, kind: input, shape index: {}]
  %s4 = inlined_call_operand.vmem [shape: f32[8,1], index: 4, kind: input, shape index: {}]
  %s5 = inlined_call_operand.vmem [shape: bf16[4,8], index: 5, kind: input, shape index: {}]
  %s6 = inlined_call_operand.vmem [shape: f32[4,1], index: 6, kind: input, shape index: {}]
  %s7 = inlined_call_operand.hbm [shape: f32[4,8], index: 7, kind: output, shape index: {}]
  %s8 = sld [smem:[#allocation0]]
  $region38: #{tpu_custom_call.1} parent=0
    _
  %s10 = ssub.s32 1, %s8
  %s11 = scalar_select 0, %s10, %s8
  $region1: #{tpu_custom_call.1} parent=0
    #allocation2 [shape = 'u8[2048]{0}', space=vmem, size = 0x800, scoped, tag = 'output window, operand 0, single buffered']
    #allocation3 [shape = 's32[1]{0}', space=sflag, size = 0x4, scoped, tag = 'scoped memory for tpu_custom_call.1']
    %12 = vsyncpa [#allocation3], 0
    // Predicated region
    $region2: #{tpu_custom_call.1} parent=1 // pred_check
      _
    $region3: #{tpu_custom_call.1} parent=1 // pred_check_branch
      %14 = sbr.rel (0) target = $region5
    $region4: #{tpu_custom_call.1} parent=1 // pred_region
      _
    $region5: #{tpu_custom_call.1} parent=1 // pred_fallthru
      _
    // Predicated region
    $region6: #{tpu_custom_call.1} parent=1 // pred_check
      _
    $region7: #{tpu_custom_call.1} parent=1 // pred_check_branch
      %16 = sbr.rel (0) target = $region9
    $region8: #{tpu_custom_call.1} parent=1 // pred_region
      _
    $region9: #{tpu_custom_call.1} parent=1 // pred_fallthru
      _
    // Predicated region
    $region10: #{tpu_custom_call.1} parent=1 // pred_check
      _
    $region11: #{tpu_custom_call.1} parent=1 // pred_check_branch
      %18 = sbr.rel (0) target = $region13
    $region12: #{tpu_custom_call.1} parent=1 // pred_region
      _
    $region13: #{tpu_custom_call.1} parent=1 // pred_fallthru
      _
    // Predicated region
    $region14: #{tpu_custom_call.1} parent=1 // pred_check
      _
    $region15: #{tpu_custom_call.1} parent=1 // pred_check_branch
      %20 = sbr.rel (0) target = $region17
    $region16: #{tpu_custom_call.1} parent=1 // pred_region
      _
    $region17: #{tpu_custom_call.1} parent=1 // pred_fallthru
      _
    // Predicated region
    $region18: #{tpu_custom_call.1} parent=1 // pred_check
      _
    $region19: #{tpu_custom_call.1} parent=1 // pred_check_branch
      %22 = sbr.rel (0) target = $region21
    $region20: #{tpu_custom_call.1} parent=1 // pred_region
      _
    $region21: #{tpu_custom_call.1} parent=1 // pred_fallthru
      _
    // Predicated region
    $region22: #{tpu_custom_call.1} parent=1 // pred_check
      _
    $region23: #{tpu_custom_call.1} parent=1 // pred_check_branch
      %24 = sbr.rel (0) target = $region25
    $region24: #{tpu_custom_call.1} parent=1 // pred_region
      _
    $region25: #{tpu_custom_call.1} parent=1 // pred_fallthru
      _
    // Predicated region
    $region26: #{tpu_custom_call.1} parent=1 // pred_check
      _
    $region27: #{tpu_custom_call.1} parent=1 // pred_check_branch
      %26 = sbr.rel (0) target = $region29
    $region28: #{tpu_custom_call.1} parent=1 // pred_region
      _
    $region29: #{tpu_custom_call.1} parent=1 // pred_fallthru
      _
    %v28 = vld [vmem:[%s0] sm:$0xff]
    %v29 = vpack.c.bf16 %v28, %v28
    %v30 = vld [vmem:[%s1] sm:$0xf]
    %v31 = vld [vmem:[%s1 + $0x4] sm:$0xf]
    %v32 = vld [vmem:[%s2] sm:$0xff]
    %v33 = vld [vmem:[%s2 + $0x8] sm:$0xff]
    %35 = vset.pattern.permute.xlu0 0
    %36 = vperm.xlu0 %35, %v32
    %v37 = vpop.permute.xlu0 %36
    %40 = vset.pattern.permute.xlu0 0
    %41 = vperm.xlu0 %40, %v33
    %v42 = vpop.permute.xlu0 %41
    %v46 = vunpack.c.l.b16 %v30
    %v47 = vunpack.c.l.b16 %v31
    %v48 = vpack.c.b16 %v47, %v46
    %vm49 = vcmask 261120
    %v51 = vsel %vm49, %v48, 0
    %v54 = vsel %vm49, %v29, 0
    %56 = vmatprep.subr.bf16.mxu0 0
    %57 = vmatpush1.bf16.xpose.msra.mxu0 %v54
    %58 = vmatprep.subr.bf16.mxu0 0
    %59 = vmatpush1.bf16.xpose.msra.mxu0 0
    %60 = vmatprep.subr.bf16.mxu0 0
    %61 = vmatpush1.bf16.xpose.msra.mxu0 0
    %62 = vmatprep.subr.bf16.mxu0 0
    %63 = vmatpush1.bf16.xpose.msra.mxu0 0
    %64 = vmatprep.subr.bf16.mxu0 0
    %65 = vmatpush1.bf16.xpose.msra.mxu0 0
    %66 = vmatprep.subr.bf16.mxu0 0
    %67 = vmatpush1.bf16.xpose.msra.mxu0 0
    %68 = vmatprep.subr.bf16.mxu0 0
    %69 = vmatpush1.bf16.xpose.msra.mxu0 0
    %70 = vmatprep.subr.bf16.mxu0 0
    %71 = vmatpush1.bf16.xpose.msra.mxu0 0
    %72 = vmatprep.subr.bf16.mxu0 0
    %73 = vmatpush1.bf16.xpose.msra.mxu0 0
    %74 = vmatprep.subr.bf16.mxu0 0
    %75 = vmatpush1.bf16.xpose.msra.mxu0 0
    %76 = vmatprep.subr.bf16.mxu0 0
    %77 = vmatpush1.bf16.xpose.msra.mxu0 0
    %78 = vmatprep.subr.bf16.mxu0 0
    %79 = vmatpush1.bf16.xpose.msra.mxu0 0
    %80 = vmatprep.subr.bf16.mxu0 0
    %81 = vmatpush1.bf16.xpose.msra.mxu0 0
    %82 = vmatprep.subr.bf16.mxu0 0
    %83 = vmatpush1.bf16.xpose.msra.mxu0 0
    %84 = vmatprep.subr.bf16.mxu0 0
    %85 = vmatpush1.bf16.xpose.msra.mxu0 0
    %86 = vmatprep.subr.bf16.mxu0 0
    %87 = vmatpush1.bf16.xpose.msra.mxu0 0
    %88 = vmatprep.mubr.bf16.mxu0 0
    %89 = vmatmul.mubr.bf16.gmra.mrb[0].mxu0 %v51
    %v90 = vpop.f32.mrb[0].mxu0
    %v91 = vadd.f32 %v37, %v90
    %v92 = vpop.f32.mrb[0].mxu0
    %v93 = vpop.f32.mrb[0].mxu0
    %v94 = vadd.f32 %v42, %v93
    %v95 = vpop.f32.mrb[0].mxu0
    %96 = vdwg.mxu0
    %v97 = vxor.u32 %v91, 2147483648
    %v98 = vxor.u32 %v94, 2147483648
    %v99 = vmul.f32 %v97, 1.442695
    %v100 = vpow.pop %v99
    %v101 = vmul.f32 %v98, 1.442695
    %v102 = vpow.pop %v101
    %v103 = vadd.f32 %v100, 1.0
    %v104 = vadd.f32 %v102, 1.0
    %v105 = vrcp.pop %v103
    %v106 = vmul.f32 1.0, %v105
    %v107 = vrcp.pop %v104
    %v108 = vmul.f32 1.0, %v107
    %v109 = vmul.f32 %v91, %v106
    %v110 = vmul.f32 %v94, %v108
    %v111 = vld [vmem:[%s3] sm:$0xf]
    %v112 = vpack.c.bf16 %v110, %v109
    %v113 = vld [vmem:[%s4] sm:$0xff]
    %115 = vset.pattern.permute.xlu0 0
    %116 = vperm.xlu0 %115, %v113
    %v117 = vpop.permute.xlu0 %116
    %vm119 = vcmask 130048
    %v121 = vsel %vm119, %v111, 0
    %123 = vmatprep.subr.bf16.mxu0 0
    %124 = vmatpush1.bf16.msra.mxu0 %v112
    %125 = vmatprep.subr.bf16.mxu0 0
    %126 = vmatpush1.bf16.msra.mxu0 0
    %127 = vmatprep.subr.bf16.mxu0 0
    %128 = vmatpush1.bf16.msra.mxu0 0
    %129 = vmatprep.subr.bf16.mxu0 0
    %130 = vmatpush1.bf16.msra.mxu0 0
    %131 = vmatprep.subr.bf16.mxu0 0
    %132 = vmatpush1.bf16.msra.mxu0 0
    %133 = vmatprep.subr.bf16.mxu0 0
    %134 = vmatpush1.bf16.msra.mxu0 0
    %135 = vmatprep.subr.bf16.mxu0 0
    %136 = vmatpush1.bf16.msra.mxu0 0
    %137 = vmatprep.subr.bf16.mxu0 0
    %138 = vmatpush1.bf16.msra.mxu0 0
    %139 = vmatprep.subr.bf16.mxu0 0
    %140 = vmatpush1.bf16.msra.mxu0 0
    %141 = vmatprep.subr.bf16.mxu0 0
    %142 = vmatpush1.bf16.msra.mxu0 0
    %143 = vmatprep.subr.bf16.mxu0 0
    %144 = vmatpush1.bf16.msra.mxu0 0
    %145 = vmatprep.subr.bf16.mxu0 0
    %146 = vmatpush1.bf16.msra.mxu0 0
    %147 = vmatprep.subr.bf16.mxu0 0
    %148 = vmatpush1.bf16.msra.mxu0 0
    %149 = vmatprep.subr.bf16.mxu0 0
    %150 = vmatpush1.bf16.msra.mxu0 0
    %151 = vmatprep.subr.bf16.mxu0 0
    %152 = vmatpush1.bf16.msra.mxu0 0
    %153 = vmatprep.subr.bf16.mxu0 0
    %154 = vmatpush1.bf16.msra.mxu0 0
    %155 = vmatprep.mubr.bf16.mxu0 0
    %156 = vmatmul.mubr.bf16.gmra.mrb[0].mxu0 %v121
    %v157 = vpop.f32.mrb[0].mxu0
    %v158 = vadd.f32 %v117, %v157
    %v159 = vpop.f32.mrb[0].mxu0
    %v160 = vpop.f32.mrb[0].mxu0
    %v161 = vpop.f32.mrb[0].mxu0
    %162 = vdwg.mxu0
    %v163 = vxor.u32 %v158, 2147483648
    %v164 = vmul.f32 %v163, 1.442695
    %v165 = vpow.pop %v164
    %v166 = vadd.f32 %v165, 1.0
    %v167 = vrcp.pop %v166
    %v168 = vmul.f32 1.0, %v167
    %v169 = vmul.f32 %v158, %v168
    %v170 = vld [vmem:[%s5] sm:$0x3]
    %v171 = vpack.c.bf16 %v169, %v169
    %v172 = vld [vmem:[%s6] sm:$0xf]
    %174 = vset.pattern.permute.xlu0 0
    %175 = vperm.xlu0 %174, %v172
    %v176 = vpop.permute.xlu0 %175
    %vm178 = vcmask 64512
    %v180 = vsel %vm178, %v170, 0
    %vm182 = vcmask 1043456
    %v184 = vsel %vm182, %v171, 0
    %186 = vmatprep.subr.bf16.mxu0 0
    %187 = vmatpush1.bf16.msra.mxu0 %v184
    %188 = vmatprep.subr.bf16.mxu0 0
    %189 = vmatpush1.bf16.msra.mxu0 0
    %190 = vmatprep.subr.bf16.mxu0 0
    %191 = vmatpush1.bf16.msra.mxu0 0
    %192 = vmatprep.subr.bf16.mxu0 0
    %193 = vmatpush1.bf16.msra.mxu0 0
    %194 = vmatprep.subr.bf16.mxu0 0
    %195 = vmatpush1.bf16.msra.mxu0 0
    %196 = vmatprep.subr.bf16.mxu0 0
    %197 = vmatpush1.bf16.msra.mxu0 0
    %198 = vmatprep.subr.bf16.mxu0 0
    %199 = vmatpush1.bf16.msra.mxu0 0
    %200 = vmatprep.subr.bf16.mxu0 0
    %201 = vmatpush1.bf16.msra.mxu0 0
    %202 = vmatprep.subr.bf16.mxu0 0
    %203 = vmatpush1.bf16.msra.mxu0 0
    %204 = vmatprep.subr.bf16.mxu0 0
    %205 = vmatpush1.bf16.msra.mxu0 0
    %206 = vmatprep.subr.bf16.mxu0 0
    %207 = vmatpush1.bf16.msra.mxu0 0
    %208 = vmatprep.subr.bf16.mxu0 0
    %209 = vmatpush1.bf16.msra.mxu0 0
    %210 = vmatprep.subr.bf16.mxu0 0
    %211 = vmatpush1.bf16.msra.mxu0 0
    %212 = vmatprep.subr.bf16.mxu0 0
    %213 = vmatpush1.bf16.msra.mxu0 0
    %214 = vmatprep.subr.bf16.mxu0 0
    %215 = vmatpush1.bf16.msra.mxu0 0
    %216 = vmatprep.subr.bf16.mxu0 0
    %217 = vmatpush1.bf16.msra.mxu0 0
    %218 = vmatprep.mubr.bf16.mxu0 0
    %219 = vmatmul.mubr.bf16.gmra.mrb[0].mxu0 %v180
    %v220 = vpop.f32.mrb[0].mxu0
    %v221 = vadd.f32 %v176, %v220
    %v222 = vpop.f32.mrb[0].mxu0
    %v223 = vpop.f32.mrb[0].mxu0
    %v224 = vpop.f32.mrb[0].mxu0
    %225 = vdwg.mxu0
    %vm226 = vcmask 60416
    %227 = vst.msk [vmem:[#allocation2] sm:$0xf] %vm226, %v221
    // Predicated region
    $region30: #{tpu_custom_call.1} parent=1 // pred_check
      _
    $region31: #{tpu_custom_call.1} parent=1 // pred_check_branch
      %229 = sbr.rel (0) target = $region33
    $region32: #{tpu_custom_call.1} parent=1 // pred_region
      %s231 = ssub.s32 64, 64
      %232 = vsyncadd [#allocation3], %s231
      %s234 = sshll.u32 [#allocation2], 4
      %s235 = int_to_ptr.vmem [resolvable:$true] %s234
      %237 = dma.vmem_to_hbm [thread:$0]  %s235, 64, %s7, [#allocation3]
    $region33: #{tpu_custom_call.1} parent=1 // pred_fallthru
      _
    // Predicated region
    $region34: #{tpu_custom_call.1} parent=1 // pred_check
      _
    $region35: #{tpu_custom_call.1} parent=1 // pred_check_branch
      %239 = sbr.rel (0) target = $region37
    $region36: #{tpu_custom_call.1} parent=1 // pred_region
      %240 = dma.done [#allocation3], 64
    $region37: #{tpu_custom_call.1} parent=1 // pred_fallthru
      _
    %241 = vsyncpa [#allocation3], 1

</llo_original>
